<compile_context>
chip_gen: v7x
topology: tpu7x:2x2x1
jax: 0.10.0
libtpu: 0.0.40
codegen_flags: <defaults>
</compile_context>

<pallas_src>
import functools

import numpy as np
import jax
import jax.numpy as jnp
from jax.experimental import pallas as pl
from jax.experimental.pallas import tpu as pltpu


def _round_up(x: int, m: int) -> int:
    return ((x + m - 1) // m) * m


def _bilinear_taps(out_size: int, in_size: int):
    """Per-output-pixel 2-tap bilinear weights (torchvision BILINEAR, align_corners=False)."""
    scale = in_size / out_size
    dst = np.arange(out_size, dtype=np.float64)
    src = np.clip((dst + 0.5) * scale - 0.5, 0.0, float(in_size - 1))
    x0 = np.floor(src).astype(np.int64)
    x1 = np.minimum(x0 + 1, in_size - 1)
    frac = (src - x0).astype(np.float32)
    return x0, x1, frac


def _bilinear_matrix_np(out_size: int, in_size: int) -> np.ndarray:
    """(out_size, in_size) dense interpolation matrix built from the 2 taps directly
    (no O(in^2) identity gather)."""
    x0, x1, frac = _bilinear_taps(out_size, in_size)
    m = np.zeros((out_size, in_size), dtype=np.float32)
    rows = np.arange(out_size)
    m[rows, x0] += 1.0 - frac
    m[rows, x1] += frac
    return m


def _resize_kernel(starts_ref, a_ref, x_ref, b_ref, o_ref, *, c, h, band_h, aligned_starts):
    """One output-row tile: column interp on the source band, channel interleave, row interp.

    starts_ref : SMEM (num_tiles,) int32  — first source row of this tile's band
    a_ref      : (tile_h, band_h)         — banded row-interp weights for this tile
    x_ref      : (c*h, w)                 — whole image, channel-major rows (resident)
    b_ref      : (w, out_w_pad)           — column-interp weights, lane padded (resident)
    o_ref      : (tile_h, c*out_w_pad)    — lane-dense output tile
    """
    i = pl.program_id(0)
    start = starts_ref[i]
    if aligned_starts:           # starts are built as multiples of 8 whenever h % 8 == 0
        start = pl.multiple_of(start, 8)

    # (1) Column interpolation: ONE fat MXU matmul over the band of ALL channels.
    xb = jnp.concatenate(
        [x_ref[pl.ds(ci * h + start, band_h), :] for ci in range(c)], axis=0)   # (c*band_h, w)
    tmp = jnp.dot(xb, b_ref[...], preferred_element_type=jnp.float32)           # (c*band_h, out_w_pad) f32

    # (2) Channel interleave (c*band_h, out_w_pad) -> (band_h, c*out_w_pad): static sublane
    #     slices + a lane concat (out_w_pad % 128 == 0 keeps it layout-only). Kept in f32 so
    #     the second matmul does not add a second rounding on top of the bf16 inputs.
    tmp_t = jnp.concatenate(
        [tmp[ci * band_h:(ci + 1) * band_h, :] for ci in range(c)], axis=1)     # (band_h, c*out_w_pad)

    # (3) Row interpolation: ONE 2D MXU matmul, lane-dense output store.
    out = jnp.dot(a_ref[...], tmp_t, preferred_element_type=jnp.float32)        # (tile_h, c*out_w_pad)
    o_ref[...] = out.astype(o_ref.dtype)


@functools.lru_cache(maxsize=None)
def _build_resize_call(c, h, w, out_w, out_w_pad, final_h, tile_h, band_h, num_tiles,
                       compute_dtype, out_dtype):
    cdt = np.dtype(compute_dtype)
    odt = np.dtype(out_dtype)
    final_h_pad = num_tiles * tile_h
    aligned = (h % 8 == 0)

    kernel = functools.partial(_resize_kernel, c=c, h=h, band_h=band_h, aligned_starts=aligned)

    # Advisory cost hint so XLA schedules surrounding ops sensibly.
    flops = 2 * num_tiles * (c * band_h * w * out_w_pad + tile_h * band_h * c * out_w_pad)
    bytes_accessed = ((c * h * w + w * out_w_pad + num_tiles * tile_h * band_h) * cdt.itemsize
                      + final_h_pad * c * out_w_pad * odt.itemsize + num_tiles * 4)

    # Keep (double-buffered) VMEM inside the scoped limit; only raise the limit when needed.
    resident = (c * h * w + w * out_w_pad) * cdt.itemsize
    per_tile = tile_h * band_h * cdt.itemsize + tile_h * c * out_w_pad * odt.itemsize
    scratch = (c * band_h * (w + 2 * out_w_pad) + band_h * c * out_w_pad
               + tile_h * c * out_w_pad) * 4
    vmem_est = 2 * (resident + per_tile) + scratch
    cp_kwargs = dict(dimension_semantics=("parallel",))   # row tiles are independent (2 TCs on v7x)
    if vmem_est > 30 * 1024 * 1024:
        cp_kwargs["vmem_limit_bytes"] = int(min(vmem_est * 5 // 4, 64 * 1024 * 1024))

    resize = pl.pallas_call(
        kernel,
        out_shape=jax.ShapeDtypeStruct((final_h_pad, c * out_w_pad), odt),
        grid_spec=pltpu.PrefetchScalarGridSpec(
            num_scalar_prefetch=1,                         # per-tile band-start rows (SMEM)
            grid=(num_tiles,),
            in_specs=[
                pl.BlockSpec((None, tile_h, band_h), lambda i, starts: (i, 0, 0)),  # banded A
                pl.BlockSpec((c * h, w), lambda i, starts: (0, 0)),                 # image (resident)
                pl.BlockSpec((w, out_w_pad), lambda i, starts: (0, 0)),             # B (resident)
            ],
            out_specs=pl.BlockSpec((tile_h, c * out_w_pad), lambda i, starts: (i, 0)),
        ),
        compiler_params=pltpu.CompilerParams(**cp_kwargs),
        cost_estimate=pl.CostEstimate(flops=int(flops), transcendentals=0,
                                      bytes_accessed=int(bytes_accessed)),
    )

    def fn(starts, a_band, image, b_pad):
        # Wrapper-side cast + flatten (review): the kernel sees a matmul-ready 2D slab.
        x2 = image.astype(cdt).reshape(c * h, w)
        out_flat = resize(starts, a_band, x2, b_pad)       # (final_h_pad, c*out_w_pad)
        out = out_flat[:final_h].reshape(final_h, c, out_w_pad)[:, :, :out_w]
        return jnp.transpose(out, (1, 0, 2))               # (c, final_h, out_w)

    return jax.jit(fn)


def bilinear_resize_crop_top_square(image, out_h: int, out_w: int,
                                    compute_dtype=jnp.bfloat16, max_tile_h: int = 256):
    """Bilinear resize of a (C,H,W) image to (out_h, out_w) followed by CropTopSquare,
    fused into one Pallas kernel. Rows removed by the crop are never computed."""
    c, h, w = image.shape
    final_h = out_w if out_h > out_w else out_h             # CropTopSquare folded into A

    out_w_pad = _round_up(out_w, 128)                       # lane-dense stores / MXU-aligned N
    tile_h = min(_round_up(final_h, 8), _round_up(max_tile_h, 8))
    final_h_pad = _round_up(final_h, tile_h)
    num_tiles = final_h_pad // tile_h

    # --- row-interp taps & per-tile source band (all static: zoom is known here) ---------
    x0, x1, frac = _bilinear_taps(out_h, h)                 # taps for the *uncropped* resize
    x0, x1, frac = x0[:final_h], x1[:final_h], frac[:final_h]
    pad = final_h_pad - final_h                             # zero A rows for padded tiles
    x0p = np.concatenate([x0, np.full(pad, x0[-1], np.int64)])
    x1p = np.concatenate([x1, np.full(pad, x1[-1], np.int64)])
    lo = x0p.reshape(num_tiles, tile_h).min(axis=1)
    hi = x1p.reshape(num_tiles, tile_h).max(axis=1)
    span = int((hi - lo).max()) + 1
    band_h = min(_round_up(span + 7, 8), h)                 # +7 absorbs start quantization to 8
    starts = np.minimum((lo // 8) * 8, h - band_h)
    starts = np.maximum(starts, 0).astype(np.int32)

    # Dense row-interp matrix (crop + tile padding folded in), then banded per tile.
    a_full = np.zeros((final_h_pad, h), dtype=np.float32)
    rows = np.arange(final_h)
    a_full[rows, x0] += 1.0 - frac
    a_full[rows, x1] += frac
    a_band = np.stack([a_full[i * tile_h:(i + 1) * tile_h, s:s + band_h]
                       for i, s in enumerate(starts)])      # (num_tiles, tile_h, band_h)

    # Column-interp matrix, transposed and zero-padded to a lane-dense width.
    b_pad = np.zeros((w, out_w_pad), dtype=np.float32)
    b_pad[:, :out_w] = _bilinear_matrix_np(out_w, w).T

    fn = _build_resize_call(c, h, w, out_w, out_w_pad, final_h, tile_h, band_h, num_tiles,
                            np.dtype(compute_dtype), np.dtype(image.dtype))
    return fn(jnp.asarray(starts),
              jnp.asarray(a_band, dtype=compute_dtype),
              image,
              jnp.asarray(b_pad, dtype=compute_dtype))


def _sample_zoom(key, min_zoom: float, max_zoom: float) -> float:
    # torch.rand(1) * (max - min) + min — host sync required: the resized shape is static.
    return float(jax.random.uniform(key, ())) * (max_zoom - min_zoom) + min_zoom


def random_zoom_in(image, key, min_zoom: float = 1.0, max_zoom: float = 1.5,
                   compute_dtype=jnp.bfloat16, zoom_buckets=None, max_tile_h: int = 256):
    """JAX/Pallas equivalent of RandomZoomIn.forward (resize + CropTopSquare).

    zoom_buckets: optional int. If set, the sampled zoom is snapped to a fixed grid of that
    many values so a training loop sees a bounded set of output shapes (bounded number of
    Pallas compiles, lru-cached). Default None keeps the exact PyTorch size semantics.
    """
    _, h, w = image.shape
    zoom = _sample_zoom(key, min_zoom, max_zoom)
    if zoom_buckets is not None and zoom_buckets > 1 and max_zoom > min_zoom:
        grid_vals = [min_zoom + k * (max_zoom - min_zoom) / (zoom_buckets - 1)
                     for k in range(zoom_buckets)]
        zoom = min(grid_vals, key=lambda z: abs(z - zoom))
    new_h = int(zoom * h)     # int() truncation, same as int(torch tensor)
    new_w = int(zoom * w)
    return bilinear_resize_crop_top_square(image, new_h, new_w,
                                           compute_dtype=compute_dtype, max_tile_h=max_tile_h)


def _reference(image, out_h: int, out_w: int):
    """Pure-JAX f32 reference (resize + CropTopSquare) for the correctness check."""
    a = jnp.asarray(_bilinear_matrix_np(out_h, image.shape[1]))
    b = jnp.asarray(_bilinear_matrix_np(out_w, image.shape[2]))
    out = jnp.einsum("oh,chw,pw->cop", a, image.astype(jnp.float32), b,
                     precision=jax.lax.Precision.HIGHEST)
    if out_h > out_w:
        out = out[:, :out_w, :]
    return out


if __name__ == "__main__":
    key = jax.random.PRNGKey(0)
    k_img, k_zoom = jax.random.split(key)

    # Non-square (C, H, W) so the CropTopSquare path is actually exercised.
    image = jax.random.uniform(k_img, (3, 24, 16), dtype=jnp.float32)
    min_zoom, max_zoom = 1.0, 1.5

    zoom = _sample_zoom(k_zoom, min_zoom, max_zoom)
    new_h, new_w = int(zoom * image.shape[1]), int(zoom * image.shape[2])
    ref = _reference(image, new_h, new_w)

    # Default bf16 MXU path (same zoom sample as the reference).
    out = jax.block_until_ready(random_zoom_in(image, k_zoom, min_zoom, max_zoom))
    # f32 compute path for a tight algorithmic exactness check (single row tile).
    out_f32 = jax.block_until_ready(
        bilinear_resize_crop_top_square(image, new_h, new_w, compute_dtype=jnp.float32))
    # Small row tile to exercise the multi-tile / banded / padded-tail path.
    out_f32_tiled = jax.block_until_ready(
        bilinear_resize_crop_top_square(image, new_h, new_w, compute_dtype=jnp.float32,
                                        max_tile_h=8))

    assert out.shape == ref.shape, (out.shape, ref.shape)
    assert out_f32.shape == ref.shape and out_f32_tiled.shape == ref.shape
    # f32 kernel paths must match the reference tightly (algorithm + tiling check) ...
    assert float(jnp.max(jnp.abs(out_f32 - ref))) < 1e-3
    assert float(jnp.max(jnp.abs(out_f32_tiled - ref))) < 1e-3
    # ... bf16 MXU path within bf16 rounding of the f32 reference.
    assert float(jnp.max(jnp.abs(out - ref))) < 3e-2

    print("KERNEL_OK")
</pallas_src>

<mosaic_0001>
module attributes {stable_mosaic.version = 11 : i64} {
  func.func @_resize_kernel(%arg0: i32, %arg1: memref<1xi32, #tpu.memory_space<smem>>, %arg2: memref<1x16x24xbf16, #tpu.memory_space<vmem>>, %arg3: memref<72x16xbf16, #tpu.memory_space<vmem>>, %arg4: memref<16x128xbf16, #tpu.memory_space<vmem>>, %arg5: memref<16x384xf32, #tpu.memory_space<vmem>>) attributes {dimension_semantics = [#tpu.dimension_semantics<parallel>], iteration_bounds = array<i64: 1>, scalar_prefetch = 1 : i64, scratch_operands = 0 : i64, tpu.core_type = #tpu.core_type<tc>, window_params = [{transform_indices = @transform_0, window_bounds = array<i64: 1, 16, 24>}, {pipeline_mode = #tpu.pipeline_mode<synchronous>, transform_indices = @transform_1, window_bounds = array<i64: 72, 16>}, {pipeline_mode = #tpu.pipeline_mode<synchronous>, transform_indices = @transform_2, window_bounds = array<i64: 16, 128>}, {transform_indices = @transform_3, window_bounds = array<i64: 16, 384>}]} {
    %0 = arith.index_cast %arg0 : i32 to index
    %1 = memref.load %arg1[%0] : memref<1xi32, #tpu.memory_space<smem>>
    %2 = tpu.assume_multiple %1, 8 : i32
    %c0_i32 = arith.constant 0 : i32
    %3 = arith.addi %c0_i32, %2 : i32
    %4 = arith.index_cast %3 : i32 to index
    %c0 = arith.constant 0 : index
    %5 = vector.load %arg3[%4, %c0] : memref<72x16xbf16, #tpu.memory_space<vmem>>, vector<24x16xbf16>
    %c24_i32 = arith.constant 24 : i32
    %6 = arith.addi %c24_i32, %2 : i32
    %7 = arith.index_cast %6 : i32 to index
    %c0_0 = arith.constant 0 : index
    %8 = vector.load %arg3[%7, %c0_0] : memref<72x16xbf16, #tpu.memory_space<vmem>>, vector<24x16xbf16>
    %c48_i32 = arith.constant 48 : i32
    %9 = arith.addi %c48_i32, %2 : i32
    %10 = arith.index_cast %9 : i32 to index
    %c0_1 = arith.constant 0 : index
    %11 = vector.load %arg3[%10, %c0_1] : memref<72x16xbf16, #tpu.memory_space<vmem>>, vector<24x16xbf16>
    %12 = tpu.concatenate %5, %8, %11 in 0 : vector<24x16xbf16>, vector<24x16xbf16>, vector<24x16xbf16> -> vector<72x16xbf16>
    %c0_2 = arith.constant 0 : index
    %c0_3 = arith.constant 0 : index
    %13 = vector.load %arg4[%c0_2, %c0_3] : memref<16x128xbf16, #tpu.memory_space<vmem>>, vector<16x128xbf16>
    %cst = arith.constant dense<0.000000e+00> : vector<72x128xf32>
    %14 = tpu.matmul %12, %13, %cst {dimension_numbers = #tpu.dot_dimension_numbers<[1], [0], [0], [1], [0, 0, 1, 1], [], []>} : vector<72x16xbf16>, vector<16x128xbf16>, vector<72x128xf32> -> vector<72x128xf32>
    %15 = vector.extract_strided_slice %14 {offsets = [0, 0], sizes = [24, 128], strides = [1, 1]} : vector<72x128xf32> to vector<24x128xf32>
    %16 = vector.extract_strided_slice %14 {offsets = [24, 0], sizes = [24, 128], strides = [1, 1]} : vector<72x128xf32> to vector<24x128xf32>
    %17 = vector.extract_strided_slice %14 {offsets = [48, 0], sizes = [24, 128], strides = [1, 1]} : vector<72x128xf32> to vector<24x128xf32>
    %18 = tpu.concatenate %15, %16, %17 in 1 : vector<24x128xf32>, vector<24x128xf32>, vector<24x128xf32> -> vector<24x384xf32>
    %c0_4 = arith.constant 0 : index
    %c0_5 = arith.constant 0 : index
    %c0_6 = arith.constant 0 : index
    %19 = vector.load %arg2[%c0_4, %c0_5, %c0_6] : memref<1x16x24xbf16, #tpu.memory_space<vmem>>, vector<1x16x24xbf16>
    %20 = vector.shape_cast %19 : vector<1x16x24xbf16> to vector<16x24xbf16>
    %cst_7 = arith.constant dense<0.000000e+00> : vector<16x384xf32>
    %21 = tpu.matmul %20, %18, %cst_7 {dimension_numbers = #tpu.dot_dimension_numbers<[1], [0], [0], [1], [0, 0, 1, 1], [], []>} : vector<16x24xbf16>, vector<24x384xf32>, vector<16x384xf32> -> vector<16x384xf32>
    %c0_8 = arith.constant 0 : index
    %c0_9 = arith.constant 0 : index
    %22 = vector.load %arg5[%c0_8, %c0_9] : memref<16x384xf32, #tpu.memory_space<vmem>>, vector<16x384xf32>
    tpu.vector_store %arg5[%c0_8, %c0_9], %21 {strides = array<i32>} : memref<16x384xf32, #tpu.memory_space<vmem>>, vector<16x384xf32>,
    return
  }
  func.func @transform_0(%arg0: i32, %arg1: memref<1xi32, #tpu.memory_space<smem>>) -> (i32, i32, i32) {
    %c0_i32 = arith.constant 0 : i32
    %c0_i32_0 = arith.constant 0 : i32
    %c0_i32_1 = arith.constant 0 : i32
    return %arg0, %c0_i32, %c0_i32_0 : i32, i32, i32
  }
  func.func @transform_1(%arg0: i32, %arg1: memref<1xi32, #tpu.memory_space<smem>>) -> (i32, i32) {
    %c0_i32 = arith.constant 0 : i32
    %c0_i32_0 = arith.constant 0 : i32
    %c0_i32_1 = arith.constant 0 : i32
    return %c0_i32, %c0_i32_0 : i32, i32
  }
  func.func @transform_2(%arg0: i32, %arg1: memref<1xi32, #tpu.memory_space<smem>>) -> (i32, i32) {
    %c0_i32 = arith.constant 0 : i32
    %c0_i32_0 = arith.constant 0 : i32
    %c0_i32_1 = arith.constant 0 : i32
    return %c0_i32, %c0_i32_0 : i32, i32
  }
  func.func @transform_3(%arg0: i32, %arg1: memref<1xi32, #tpu.memory_space<smem>>) -> (i32, i32) {
    %c0_i32 = arith.constant 0 : i32
    %c0_i32_0 = arith.constant 0 : i32
    return %arg0, %c0_i32 : i32, i32
  }
}

</mosaic_0001>

<llo_original>
// kernel: fn.1
$region0: #{fn.1}
  #allocation0 [shape = 'u32[]', space=smem, size = 0x4, offset = 0x4, fixed_abs, tag = 'smem constant byte address 0x4 - core index']
  #allocation1 [shape = 'u32[144,128]{1,0:T(1,128)}', space=vmem, size = 0x12000, scoped, tag = 'internal scratch']
  #allocation2 [shape = 's32[1]{0}', space=sflag, size = 0x4, scoped, tag = 'scoped memory for fn.1']
  #allocation3 [shape = 's32[1]{0:T(128)S(6)}', space=smem, size = 0x200, scoped, tag = 'prefetched SMEM operand 0']
  %s0 = inlined_call_operand.<no memory space> [shape: s32[1], index: 0, kind: input, shape index: {}]
  %s1 = inlined_call_operand.vmem [shape: bf16[1,16,24], index: 1, kind: input, shape index: {}]
  %s2 = inlined_call_operand.vmem [shape: bf16[72,16], index: 2, kind: input, shape index: {}]
  %s3 = inlined_call_operand.vmem [shape: bf16[16,128], index: 3, kind: input, shape index: {}]
  %s4 = inlined_call_operand.vmem [shape: f32[16,384], index: 4, kind: output, shape index: {}]
  %s5 = sld [smem:[#allocation0]]
  $region22: #{fn.1} parent=0
    _
  %s7 = ssub.s32 1, %s5
  %s8 = scalar_select 0, %s7, %s5
  %9 = sst [smem:[#allocation3]] %s0
  // Predicated region
  $region2: #{fn.1} parent=0 // pred_check
    _
  $region3: #{fn.1} parent=0 // pred_check_branch
    %11 = sbr.rel (0) target = $region5
  $region4: #{fn.1} parent=0 // pred_region
    _
  $region5: #{fn.1} parent=0 // pred_fallthru
    _
  // Predicated region
  $region6: #{fn.1} parent=0 // pred_check
    _
  $region7: #{fn.1} parent=0 // pred_check_branch
    %13 = sbr.rel (0) target = $region9
  $region8: #{fn.1} parent=0 // pred_region
    _
  $region9: #{fn.1} parent=0 // pred_fallthru
    _
  // Predicated region
  $region10: #{fn.1} parent=0 // pred_check
    _
  $region11: #{fn.1} parent=0 // pred_check_branch
    %15 = sbr.rel (0) target = $region13
  $region12: #{fn.1} parent=0 // pred_region
    _
  $region13: #{fn.1} parent=0 // pred_fallthru
    _
  %s17 = sld [smem:[#allocation3]]
  %s18 = sshra.s32 %s17, 3
  %s19 = sand.u32 %s17, 7
  %s20 = smul.addr %s18, 4
  %s21 = scalar_lea.vmem %s2, %s20
  %v22 = vld [vmem:[%s21] sm:$0xf]
  %v23 = vld [vmem:[%s21 + $0x4] sm:$0xf]
  %v24 = vld [vmem:[%s21 + $0x8] sm:$0xf]
  %s25 = sadd.s32 %s17, 24
  %s26 = sshra.s32 %s25, 3
  %s27 = sand.u32 %s25, 7
  %s28 = smul.addr %s26, 4
  %s29 = scalar_lea.vmem %s2, %s28
  %v30 = vld [vmem:[%s29] sm:$0xf]
  %v31 = vld [vmem:[%s29 + $0x4] sm:$0xf]
  %v32 = vld [vmem:[%s29 + $0x8] sm:$0xf]
  %s33 = sadd.s32 %s17, 48
  %s34 = sshra.s32 %s33, 3
  %s35 = sand.u32 %s33, 7
  %s36 = smul.addr %s34, 4
  %s37 = scalar_lea.vmem %s2, %s36
  %v38 = vld [vmem:[%s37] sm:$0xf]
  %v39 = vld [vmem:[%s37 + $0x4] sm:$0xf]
  %v40 = vld [vmem:[%s37 + $0x8] sm:$0xf]
  %v44 = vunpack.c.l.b16 %v22
  %v45 = vunpack.c.l.b16 %v23
  %v46 = vunpack.c.l.b16 %v24
  %v47 = vpack.c.b16 %v45, %v44
  %v48 = vpack.c.b16 %v46, %v46
  %v52 = vunpack.c.l.b16 %v30
  %v53 = vunpack.c.l.b16 %v31
  %v54 = vunpack.c.l.b16 %v32
  %v55 = vpack.c.b16 %v52, %v52
  %v56 = vpack.c.b16 %v54, %v53
  %v60 = vunpack.c.l.b16 %v38
  %v61 = vunpack.c.l.b16 %v39
  %v62 = vunpack.c.l.b16 %v40
  %v63 = vpack.c.b16 %v61, %v60
  %v64 = vpack.c.b16 %v62, %v62
  %vm65 = vcmask 1043456
  %v68 = vsel %vm65, %v48, %v55
  %v69 = vld [vmem:[%s3] sm:$0xf]
  %v70 = vld [vmem:[%s3 + $0x4] sm:$0xf]
  %v73 = vunpack.c.l.b16 %v69
  %v74 = vunpack.c.l.b16 %v70
  %v75 = vpack.c.b16 %v74, %v73
  %vm77 = vcmask 130048
  %v79 = vsel %vm77, %v47, 0
  %v81 = vsel %vm77, %v68, 0
  %v84 = vsel %vm77, %v56, 0
  %v87 = vsel %vm77, %v63, 0
  %v90 = vsel %vm77, %v64, 0
  %92 = vmatprep.subr.bf16.mxu0 0
  %93 = vmatpush1.bf16.msra.mxu0 %v75
  %94 = vmatprep.subr.bf16.mxu0 0
  %95 = vmatpush1.bf16.msra.mxu0 0
  %96 = vmatprep.subr.bf16.mxu0 0
  %97 = vmatpush1.bf16.msra.mxu0 0
  %98 = vmatprep.subr.bf16.mxu0 0
  %99 = vmatpush1.bf16.msra.mxu0 0
  %100 = vmatprep.subr.bf16.mxu0 0
  %101 = vmatpush1.bf16.msra.mxu0 0
  %102 = vmatprep.subr.bf16.mxu0 0
  %103 = vmatpush1.bf16.msra.mxu0 0
  %104 = vmatprep.subr.bf16.mxu0 0
  %105 = vmatpush1.bf16.msra.mxu0 0
  %106 = vmatprep.subr.bf16.mxu0 0
  %107 = vmatpush1.bf16.msra.mxu0 0
  %108 = vmatprep.subr.bf16.mxu0 0
  %109 = vmatpush1.bf16.msra.mxu0 0
  %110 = vmatprep.subr.bf16.mxu0 0
  %111 = vmatpush1.bf16.msra.mxu0 0
  %112 = vmatprep.subr.bf16.mxu0 0
  %113 = vmatpush1.bf16.msra.mxu0 0
  %114 = vmatprep.subr.bf16.mxu0 0
  %115 = vmatpush1.bf16.msra.mxu0 0
  %116 = vmatprep.subr.bf16.mxu0 0
  %117 = vmatpush1.bf16.msra.mxu0 0
  %118 = vmatprep.subr.bf16.mxu0 0
  %119 = vmatpush1.bf16.msra.mxu0 0
  %120 = vmatprep.subr.bf16.mxu0 0
  %121 = vmatpush1.bf16.msra.mxu0 0
  %122 = vmatprep.subr.bf16.mxu0 0
  %123 = vmatpush1.bf16.msra.mxu0 0
  %124 = vmatprep.mubr.bf16.mxu0 0
  %125 = vmatmul.mubr.bf16.gmra.mrb[0].mxu0 %v79
  %v126 = vpop.f32.mrb[0].mxu0
  %v127 = vadd.f32 0.0, %v126
  %v128 = vpop.f32.mrb[0].mxu0
  %v129 = vpop.f32.mrb[0].mxu0
  %v130 = vadd.f32 0.0, %v129
  %v131 = vpop.f32.mrb[0].mxu0
  %132 = vmatprep.mubr.bf16.mxu0 0
  %133 = vmatmul.mubr.bf16.gmra.mrb[0].mxu0 %v81
  %v134 = vpop.f32.mrb[0].mxu0
  %v135 = vadd.f32 0.0, %v134
  %v136 = vpop.f32.mrb[0].mxu0
  %v137 = vpop.f32.mrb[0].mxu0
  %v138 = vadd.f32 0.0, %v137
  %v139 = vpop.f32.mrb[0].mxu0
  %140 = vmatprep.mubr.bf16.mxu0 0
  %141 = vmatmul.mubr.bf16.gmra.mrb[0].mxu0 %v84
  %v142 = vpop.f32.mrb[0].mxu0
  %v143 = vadd.f32 0.0, %v142
  %v144 = vpop.f32.mrb[0].mxu0
  %v145 = vpop.f32.mrb[0].mxu0
  %v146 = vadd.f32 0.0, %v145
  %v147 = vpop.f32.mrb[0].mxu0
  %148 = vmatprep.mubr.bf16.mxu0 0
  %149 = vmatmul.mubr.bf16.gmra.mrb[0].mxu0 %v87
  %v150 = vpop.f32.mrb[0].mxu0
  %v151 = vadd.f32 0.0, %v150
  %v152 = vpop.f32.mrb[0].mxu0
  %v153 = vpop.f32.mrb[0].mxu0
  %v154 = vadd.f32 0.0, %v153
  %v155 = vpop.f32.mrb[0].mxu0
  %156 = vmatprep.mubr.bf16.mxu0 0
  %157 = vmatmul.mubr.bf16.gmra.mrb[0].mxu0 %v90
  %v158 = vpop.f32.mrb[0].mxu0
  %v159 = vadd.f32 0.0, %v158
  %v160 = vpop.f32.mrb[0].mxu0
  %v161 = vpop.f32.mrb[0].mxu0
  %v162 = vpop.f32.mrb[0].mxu0
  %163 = vdwg.mxu0
  %v164 = vld [vmem:[%s1] sm:$0xf]
  %v165 = vld [vmem:[%s1 + $0x4] sm:$0xf]
  %v168 = vunpack.c.l.b16 %v164
  %v169 = vunpack.c.l.b16 %v165
  %v170 = vpack.c.b16 %v169, %v168
  %vm171 = vcmask 195584
  %v173 = vsel %vm171, %v170, 0
  %175 = vmatprep.subr.mxu0 %v138
  %176 = vmatpush1.msra.mxu0 %v127
  %177 = vmatprep.subr.mxu0 %v143
  %178 = vmatpush1.msra.mxu0 %v130
  %179 = vmatprep.subr.mxu0 %v146
  %180 = vmatpush1.msra.mxu0 %v135
  %181 = vmatprep.subr.mxu0 0.0
  %182 = vmatpush1.msra.mxu0 0.0
  %183 = vmatprep.subr.mxu0 0.0
  %184 = vmatpush1.msra.mxu0 0.0
  %185 = vmatprep.subr.mxu0 0.0
  %186 = vmatpush1.msra.mxu0 0.0
  %187 = vmatprep.subr.mxu0 0.0
  %188 = vmatpush1.msra.mxu0 0.0
  %189 = vmatprep.subr.mxu0 0.0
  %190 = vmatpush1.msra.mxu0 0.0
  %191 = vmatprep.subr.mxu0 0.0
  %192 = vmatpush1.msra.mxu0 0.0
  %193 = vmatprep.subr.mxu0 0.0
  %194 = vmatpush1.msra.mxu0 0.0
  %195 = vmatprep.subr.mxu0 0.0
  %196 = vmatpush1.msra.mxu0 0.0
  %197 = vmatprep.subr.mxu0 0.0
  %198 = vmatpush1.msra.mxu0 0.0
  %199 = vmatprep.subr.mxu0 0.0
  %200 = vmatpush1.msra.mxu0 0.0
  %201 = vmatprep.subr.mxu0 0.0
  %202 = vmatpush1.msra.mxu0 0.0
  %203 = vmatprep.subr.mxu0 0.0
  %204 = vmatpush1.msra.mxu0 0.0
  %205 = vmatprep.subr.mxu0 0.0
  %206 = vmatpush1.msra.mxu0 0.0
  %207 = vmatprep.subr.mxu0 0.0
  %208 = vmatpush1.msra.mxu0 0.0
  %209 = vmatprep.subr.mxu0 0.0
  %210 = vmatpush1.msra.mxu0 0.0
  %211 = vmatprep.subr.mxu0 0.0
  %212 = vmatpush1.msra.mxu0 0.0
  %213 = vmatprep.subr.mxu0 0.0
  %214 = vmatpush1.msra.mxu0 0.0
  %215 = vmatprep.subr.mxu0 0.0
  %216 = vmatpush1.msra.mxu0 0.0
  %217 = vmatprep.subr.mxu0 0.0
  %218 = vmatpush1.msra.mxu0 0.0
  %219 = vmatprep.subr.mxu0 0.0
  %220 = vmatpush1.msra.mxu0 0.0
  %221 = vmatprep.subr.mxu0 0.0
  %222 = vmatpush1.msra.mxu0 0.0
  %223 = vmatprep.subr.mxu0 0.0
  %224 = vmatpush1.msra.mxu0 0.0
  %225 = vmatprep.subr.mxu0 0.0
  %226 = vmatpush1.msra.mxu0 0.0
  %227 = vmatprep.subr.mxu0 0.0
  %228 = vmatpush1.msra.mxu0 0.0
  %229 = vmatprep.subr.mxu0 0.0
  %230 = vmatpush1.msra.mxu0 0.0
  %231 = vmatprep.subr.mxu0 0.0
  %232 = vmatpush1.msra.mxu0 0.0
  %233 = vmatprep.subr.mxu0 0.0
  %234 = vmatpush1.msra.mxu0 0.0
  %235 = vmatprep.subr.mxu0 0.0
  %236 = vmatpush1.msra.mxu0 0.0
  %237 = vmatprep.subr.mxu0 0.0
  %238 = vmatpush1.msra.mxu0 0.0
  %239 = vmatprep.mubr.bf16.mxu0 0
  %240 = vmatmul.mubr.bf16.gmra.mrb[0].mxu0 %v173
  %v241 = vpop.f32.mrb[0].mxu0
  %v242 = vadd.f32 0.0, %v241
  %v243 = vpop.f32.mrb[0].mxu0
  %v244 = vadd.f32 0.0, %v243
  %v245 = vpop.f32.mrb[0].mxu0
  %v246 = vadd.f32 0.0, %v245
  %v247 = vpop.f32.mrb[0].mxu0
  %v248 = vadd.f32 0.0, %v247
  %249 = vdwg.mxu0
  %250 = vmatprep.subr.mxu0 0.0
  %251 = vmatpush1.msra.mxu0 %v151
  %252 = vmatprep.subr.mxu0 0.0
  %253 = vmatpush1.msra.mxu0 %v154
  %254 = vmatprep.subr.mxu0 0.0
  %255 = vmatpush1.msra.mxu0 %v159
  %256 = vmatprep.subr.mxu0 0.0
  %257 = vmatpush1.msra.mxu0 0.0
  %258 = vmatprep.subr.mxu0 0.0
  %259 = vmatpush1.msra.mxu0 0.0
  %260 = vmatprep.subr.mxu0 0.0
  %261 = vmatpush1.msra.mxu0 0.0
  %262 = vmatprep.subr.mxu0 0.0
  %263 = vmatpush1.msra.mxu0 0.0
  %264 = vmatprep.subr.mxu0 0.0
  %265 = vmatpush1.msra.mxu0 0.0
  %266 = vmatprep.subr.mxu0 0.0
  %267 = vmatpush1.msra.mxu0 0.0
  %268 = vmatprep.subr.mxu0 0.0
  %269 = vmatpush1.msra.mxu0 0.0
  %270 = vmatprep.subr.mxu0 0.0
  %271 = vmatpush1.msra.mxu0 0.0
  %272 = vmatprep.subr.mxu0 0.0
  %273 = vmatpush1.msra.mxu0 0.0
  %274 = vmatprep.subr.mxu0 0.0
  %275 = vmatpush1.msra.mxu0 0.0
  %276 = vmatprep.subr.mxu0 0.0
  %277 = vmatpush1.msra.mxu0 0.0
  %278 = vmatprep.subr.mxu0 0.0
  %279 = vmatpush1.msra.mxu0 0.0
  %280 = vmatprep.subr.mxu0 0.0
  %281 = vmatpush1.msra.mxu0 0.0
  %282 = vmatprep.subr.mxu0 0.0
  %283 = vmatpush1.msra.mxu0 0.0
  %284 = vmatprep.subr.mxu0 0.0
  %285 = vmatpush1.msra.mxu0 0.0
  %286 = vmatprep.subr.mxu0 0.0
  %287 = vmatpush1.msra.mxu0 0.0
  %288 = vmatprep.subr.mxu0 0.0
  %289 = vmatpush1.msra.mxu0 0.0
  %290 = vmatprep.subr.mxu0 0.0
  %291 = vmatpush1.msra.mxu0 0.0
  %292 = vmatprep.subr.mxu0 0.0
  %293 = vmatpush1.msra.mxu0 0.0
  %294 = vmatprep.subr.mxu0 0.0
  %295 = vmatpush1.msra.mxu0 0.0
  %296 = vmatprep.subr.mxu0 0.0
  %297 = vmatpush1.msra.mxu0 0.0
  %298 = vmatprep.subr.mxu0 0.0
  %299 = vmatpush1.msra.mxu0 0.0
  %300 = vmatprep.subr.mxu0 0.0
  %301 = vmatpush1.msra.mxu0 0.0
  %302 = vmatprep.subr.mxu0 0.0
  %303 = vmatpush1.msra.mxu0 0.0
  %304 = vmatprep.subr.mxu0 0.0
  %305 = vmatpush1.msra.mxu0 0.0
  %306 = vmatprep.subr.mxu0 0.0
  %307 = vmatpush1.msra.mxu0 0.0
  %308 = vmatprep.subr.mxu0 0.0
  %309 = vmatpush1.msra.mxu0 0.0
  %310 = vmatprep.subr.mxu0 0.0
  %311 = vmatpush1.msra.mxu0 0.0
  %312 = vmatprep.subr.mxu0 0.0
  %313 = vmatpush1.msra.mxu0 0.0
  %314 = vmatprep.mubr.bf16.mxu0 0
  %315 = vmatmul.mubr.bf16.gmra.mrb[0].mxu0 %v173
  %v316 = vpop.f32.mrb[0].mxu0
  %v317 = vadd.f32 0.0, %v316
  %v318 = vpop.f32.mrb[0].mxu0
  %v319 = vpop.f32.mrb[0].mxu0
  %v320 = vadd.f32 0.0, %v319
  %v321 = vpop.f32.mrb[0].mxu0
  %322 = vdwg.mxu0
  %323 = vst [vmem:[%s4] sm:$0xff] %v242
  %324 = vst [vmem:[%s4 + $0x8] sm:$0xff] %v244
  %325 = vst [vmem:[%s4 + $0x10] sm:$0xff] %v317
  %326 = vst [vmem:[%s4 + $0x18] sm:$0xff] %v246
  %327 = vst [vmem:[%s4 + $0x20] sm:$0xff] %v248
  %328 = vst [vmem:[%s4 + $0x28] sm:$0xff] %v320
  // Predicated region
  $region14: #{fn.1} parent=0 // pred_check
    _
  $region15: #{fn.1} parent=0 // pred_check_branch
    %330 = sbr.rel (0) target = $region17
  $region16: #{fn.1} parent=0 // pred_region
    _
  $region17: #{fn.1} parent=0 // pred_fallthru
    _
  // Predicated region
  $region18: #{fn.1} parent=0 // pred_check
    _
  $region19: #{fn.1} parent=0 // pred_check_branch
    %332 = sbr.rel (0) target = $region21
  $region20: #{fn.1} parent=0 // pred_region
    _
  $region21: #{fn.1} parent=0 // pred_fallthru
    _

</llo_original>
